<compile_context>
chip_gen: v7x
topology: tpu7x:2x2x1
jax: 0.10.0
libtpu: 0.0.40
codegen_flags: <defaults>
</compile_context>

<pallas_src>
import jax
import jax.numpy as jnp
import numpy as np
from jax.experimental import pallas as pl
from jax.experimental.pallas import tpu as pltpu

_TILE_CAP = 32 * 1024  # samples (lanes) per grid step; (8, 32K) f32 block = 1 MiB


def _round_up(x, m):
    return (x + m - 1) // m * m


def _cdiv(a, b):
    return -(-a // b)


def _ce_weight_kernel(xt_ref, tgt_ref, w_ref, out_ref):
    """Weighted-CE partial sums over one lane-dense batch tile.

    xt_ref  : (C, TN)  logits tile (classes on sublanes, samples on lanes).
              The last tile may read out of bounds -> garbage columns.
    tgt_ref : (1, TN)  int32 targets tile; -1 marks padded / out-of-bounds columns.
    w_ref   : (C, 1)   per-class weights (same block every step).
    out_ref : (2, TN)  resident accumulator block for this shard:
              row 0 = sum of w[t] * (logsumexp - x[t])  (= -w[t]*logp[t])
              row 1 = sum of w[t]
    """
    step = pl.program_id(1)

    @pl.when(step == 0)
    def _():
        out_ref[...] = jnp.zeros_like(out_ref)

    x = xt_ref[...].astype(jnp.float32)          # (C, TN)
    tgt = tgt_ref[...]                           # (1, TN) int32
    w = w_ref[...].astype(jnp.float32)           # (C, 1)

    valid = tgt >= 0                             # (1, TN); False on padded / OOB cols
    cls = jax.lax.broadcasted_iota(jnp.int32, x.shape, 0)   # (C, TN)
    onehot = (cls == tgt).astype(jnp.float32)                # all-zero where tgt == -1

    # Numerically stable per-sample logsumexp along the class (sublane) axis.
    m = jnp.max(x, axis=0, keepdims=True)                    # (1, TN)
    lse = m + jnp.log(jnp.sum(jnp.exp(x - m), axis=0, keepdims=True))

    tgt_logit = jnp.sum(onehot * x, axis=0, keepdims=True)   # x[target]   (1, TN)
    sample_w = jnp.sum(onehot * w, axis=0, keepdims=True)    # w[target]   (1, TN)

    # Mask BEFORE accumulation: out-of-bounds logits can be Inf/NaN and would
    # otherwise poison the accumulator through lse (0 * NaN = NaN).
    wnll = jnp.where(valid, sample_w * (lse - tgt_logit), 0.0)
    sample_w = jnp.where(valid, sample_w, 0.0)

    # One full-block accumulate instead of two sliced sublane RMWs.
    out_ref[...] += jnp.concatenate([wnll, sample_w], axis=0)


@jax.jit
def weighted_cross_entropy(x, target, per_cls_weights):
    """Pallas-backed F.cross_entropy(x, target, weight=per_cls_weights, 'mean')."""
    n, c = x.shape

    # Shard across TensorCores only when both shards get meaningful work; on
    # single-TC parts (v5e/v6e) the split costs ~nothing (same total steps).
    num_shards = 2 if n >= 16384 else 1
    # Pick step count first, then size the tile from N: padding waste < 1 tile.
    steps_total = max(1, _cdiv(n, _TILE_CAP))
    steps_total = _cdiv(steps_total, num_shards) * num_shards
    tile_n = max(128, _round_up(_cdiv(n, steps_total), 128))
    steps_per_shard = steps_total // num_shards
    n_pad = steps_total * tile_n

    # Lane-dense layout for the kernel; logits are NOT padded (last block reads
    # OOB and is masked in-kernel).  Only the tiny int32 target vector is padded.
    xt = x.T                                                           # (C, n)
    tgt = jnp.pad(target.astype(jnp.int32), (0, n_pad - n),
                  constant_values=-1).reshape(1, n_pad)                # (1, n_pad)
    w2d = per_cls_weights.astype(jnp.float32).reshape(c, 1)            # (C, 1)

    cost = pl.CostEstimate(
        flops=10 * n_pad * c,
        transcendentals=n_pad * (c + 1),     # C exps per sample + one log
        bytes_accessed=(xt.size * xt.dtype.itemsize + tgt.size * 4 + c * 4
                        + num_shards * 2 * tile_n * 4),
    )

    parts = pl.pallas_call(
        _ce_weight_kernel,
        out_shape=jax.ShapeDtypeStruct((num_shards, 2, tile_n), jnp.float32),
        grid_spec=pltpu.PrefetchScalarGridSpec(
            num_scalar_prefetch=0,
            grid=(num_shards, steps_per_shard),
            in_specs=[
                pl.BlockSpec((c, tile_n),
                             lambda s, i: (0, s * steps_per_shard + i)),
                pl.BlockSpec((1, tile_n),
                             lambda s, i: (0, s * steps_per_shard + i)),
                pl.BlockSpec((c, 1), lambda s, i: (0, 0)),
            ],
            out_specs=pl.BlockSpec((None, 2, tile_n), lambda s, i: (s, 0, 0)),
        ),
        compiler_params=pltpu.CompilerParams(
            dimension_semantics=("parallel", "arbitrary"),
            vmem_limit_bytes=32 * 1024 * 1024,   # safe on v7x (64 MiB physical)
        ),
        cost_estimate=cost,
    )(xt, tgt, w2d)

    # Tiny fused JAX epilogue: cross-lane reduce + weighted-mean normalization.
    # Like F.cross_entropy, yields NaN/Inf if the effective weight sum is ~0.
    nll_sum = jnp.sum(parts[:, 0, :])
    w_sum = jnp.sum(parts[:, 1, :])
    return nll_sum / w_sum


class CEWeight:
    """JAX/Pallas port of the PyTorch CE_weight module (forward semantics)."""

    def __init__(self, cls_num_list, E1=20, E2=50, E=100):
        cls_num = np.asarray(cls_num_list, dtype=np.float32)
        w = 1.0 / cls_num
        self.num_classes = len(cls_num_list)
        self.weight = (w / w.sum() * self.num_classes).astype(np.float32)
        self.E1, self.E2, self.E = E1, E2, E

    def _per_cls_weights(self, e, f1_score):
        # TODO(synk): epoch/F1 weight schedule is host-side scalar glue (as in
        # the original module); no Pallas equivalent needed.
        if e <= self.E1:
            return np.ones(self.num_classes, dtype=np.float32)
        if e <= self.E2:
            now_power = (e - self.E1) / (self.E2 - self.E1)
            return np.power(self.weight, now_power).astype(np.float32)
        f1_array = np.clip(np.asarray(f1_score, dtype=np.float64), 1e-10, None)
        inv_f1 = 1.0 / f1_array
        weight = inv_f1 / inv_f1.sum() * self.num_classes
        # Matches the original stateful self.weight update (weight already sums
        # to C, so the renormalization is numerically a no-op).
        self.weight = (weight / weight.sum() * self.num_classes).astype(np.float32)
        now_power = (e - self.E2) / (self.E - self.E2)
        return np.power(self.weight, now_power).astype(np.float32)

    def __call__(self, x, target, e, f1_score=(1, 1, 1, 1, 1, 1, 1, 1)):
        per_cls = jnp.asarray(self._per_cls_weights(e, f1_score),
                              dtype=jnp.float32)
        return weighted_cross_entropy(x, target, per_cls)


def _reference_loss(x, target, w):
    """Pure-JAX reference: F.cross_entropy(x, target, weight=w, 'mean')."""
    logp = jax.nn.log_softmax(x.astype(jnp.float32), axis=-1)
    wt = w[target]
    picked = logp[jnp.arange(x.shape[0]), target]
    return -(wt * picked).sum() / wt.sum()


if __name__ == "__main__":
    # Deterministic synthetic setup: 8 classes, batch of 16 logit rows.
    cls_num_list = [100, 80, 60, 40, 30, 20, 10, 5]
    loss_fn = CEWeight(cls_num_list, E1=20, E2=50, E=100)

    key = jax.random.PRNGKey(0)
    kx, kt = jax.random.split(key)
    N, C = 16, len(cls_num_list)
    x = jax.random.normal(kx, (N, C), dtype=jnp.float32)
    target = jax.random.randint(kt, (N,), 0, C, dtype=jnp.int32)

    # Exercise all three epoch regimes of the original forward.
    f1 = [0.9, 0.8, 0.7, 0.6, 0.5, 0.4, 0.3, 0.2]
    loss_early = loss_fn(x, target, e=10)                 # plain CE
    loss_mid = loss_fn(x, target, e=35)                   # class-balanced CE
    loss_late = loss_fn(x, target, e=75, f1_score=f1)     # f1-weighted CE
    jax.block_until_ready((loss_early, loss_mid, loss_late))

    # Correctness check against a pure-JAX reference for each regime.
    ref_fn = CEWeight(cls_num_list, E1=20, E2=50, E=100)
    ref_early = _reference_loss(x, target, jnp.asarray(ref_fn._per_cls_weights(10, f1)))
    ref_mid = _reference_loss(x, target, jnp.asarray(ref_fn._per_cls_weights(35, f1)))
    ref_late = _reference_loss(x, target, jnp.asarray(ref_fn._per_cls_weights(75, f1)))
    np.testing.assert_allclose(np.asarray(loss_early), np.asarray(ref_early),
                               rtol=2e-5, atol=1e-6)
    np.testing.assert_allclose(np.asarray(loss_mid), np.asarray(ref_mid),
                               rtol=2e-5, atol=1e-6)
    np.testing.assert_allclose(np.asarray(loss_late), np.asarray(ref_late),
                               rtol=2e-5, atol=1e-6)

    print("KERNEL_OK")
</pallas_src>

<mosaic_0001>
module attributes {stable_mosaic.version = 11 : i64} {
  func.func @_ce_weight_kernel(%arg0: i32, %arg1: i32, %arg2: memref<8x128xf32, #tpu.memory_space<vmem>>, %arg3: memref<1x128xi32, #tpu.memory_space<vmem>>, %arg4: memref<8x1xf32, #tpu.memory_space<vmem>>, %arg5: memref<1x2x128xf32, #tpu.memory_space<vmem>>) attributes {dimension_semantics = [#tpu.dimension_semantics<parallel>, #tpu.dimension_semantics<arbitrary>], iteration_bounds = array<i64: 1, 1>, scalar_prefetch = 0 : i64, scratch_operands = 0 : i64, tpu.core_type = #tpu.core_type<tc>, window_params = [{transform_indices = @transform_0, window_bounds = array<i64: 8, 128>}, {transform_indices = @transform_1, window_bounds = array<i64: 1, 128>}, {pipeline_mode = #tpu.pipeline_mode<synchronous>, transform_indices = @transform_2, window_bounds = array<i64: 8, 1>}, {transform_indices = @transform_3, window_bounds = array<i64: 1, 2, 128>}]} {
    %c0_i32 = arith.constant 0 : i32
    %0 = arith.cmpi eq, %arg1, %c0_i32 : i32
    %1 = arith.extui %0 : i1 to i32
    %c0_i32_0 = arith.constant 0 : i32
    %2 = arith.cmpi ne, %1, %c0_i32_0 : i32
    scf.if %2 {
      %cst_18 = arith.constant 0.000000e+00 : f32
      %42 = vector.broadcast %cst_18 : f32 to vector<2x128xf32>
      %c0_19 = arith.constant 0 : index
      %c0_20 = arith.constant 0 : index
      %c0_21 = arith.constant 0 : index
      %43 = vector.load %arg5[%c0_19, %c0_20, %c0_21] : memref<1x2x128xf32, #tpu.memory_space<vmem>>, vector<1x2x128xf32>
      %44 = vector.shape_cast %43 : vector<1x2x128xf32> to vector<2x128xf32>
      %45 = vector.shape_cast %42 : vector<2x128xf32> to vector<1x2x128xf32>
      tpu.vector_store %arg5[%c0_19, %c0_20, %c0_21], %45 {strides = array<i32>} : memref<1x2x128xf32, #tpu.memory_space<vmem>>, vector<1x2x128xf32>,
    } else {
    }
    %c0 = arith.constant 0 : index
    %c0_1 = arith.constant 0 : index
    %3 = vector.load %arg2[%c0, %c0_1] : memref<8x128xf32, #tpu.memory_space<vmem>>, vector<8x128xf32>
    %c0_2 = arith.constant 0 : index
    %c0_3 = arith.constant 0 : index
    %4 = vector.load %arg3[%c0_2, %c0_3] : memref<1x128xi32, #tpu.memory_space<vmem>>, vector<1x128xi32>
    %c0_4 = arith.constant 0 : index
    %c0_5 = arith.constant 0 : index
    %5 = vector.load %arg4[%c0_4, %c0_5] : memref<8x1xf32, #tpu.memory_space<vmem>>, vector<8x1xf32>
    %c0_i32_6 = arith.constant 0 : i32
    %6 = vector.broadcast %c0_i32_6 : i32 to vector<1x128xi32>
    %7 = arith.cmpi sge, %4, %6 : vector<1x128xi32>
    %8 = tpu.iota {dimensions = array<i32: 0>} : vector<8x128xi32>
    %9 = vector.broadcast %4 : vector<1x128xi32> to vector<8x128xi32>
    %10 = arith.cmpi eq, %8, %9 : vector<8x128xi32>
    %11 = arith.extui %10 : vector<8x128xi1> to vector<8x128xi32>
    %12 = arith.sitofp %11 : vector<8x128xi32> to vector<8x128xf32>
    %cst = arith.constant dense<0xFF800000> : vector<128xf32>
    %13 = vector.multi_reduction <maximumf>, %3, %cst [0] : vector<8x128xf32> to vector<128xf32>
    %14 = vector.shape_cast %13 : vector<128xf32> to vector<1x128xf32>
    %15 = vector.broadcast %14 : vector<1x128xf32> to vector<8x128xf32>
    %16 = arith.subf %3, %15 : vector<8x128xf32>
    %17 = math.exp %16 : vector<8x128xf32>
    %cst_7 = arith.constant dense<0.000000e+00> : vector<128xf32>
    %18 = vector.multi_reduction <add>, %17, %cst_7 [0] : vector<8x128xf32> to vector<128xf32>
    %19 = vector.shape_cast %18 : vector<128xf32> to vector<1x128xf32>
    %20 = math.log %19 : vector<1x128xf32>
    %21 = arith.addf %14, %20 : vector<1x128xf32>
    %22 = arith.mulf %12, %3 : vector<8x128xf32>
    %cst_8 = arith.constant dense<0.000000e+00> : vector<128xf32>
    %23 = vector.multi_reduction <add>, %22, %cst_8 [0] : vector<8x128xf32> to vector<128xf32>
    %24 = vector.shape_cast %23 : vector<128xf32> to vector<1x128xf32>
    %25 = vector.broadcast %5 : vector<8x1xf32> to vector<8x128xf32>
    %26 = arith.mulf %12, %25 : vector<8x128xf32>
    %cst_9 = arith.constant dense<0.000000e+00> : vector<128xf32>
    %27 = vector.multi_reduction <add>, %26, %cst_9 [0] : vector<8x128xf32> to vector<128xf32>
    %28 = vector.shape_cast %27 : vector<128xf32> to vector<1x128xf32>
    %29 = arith.subf %21, %24 : vector<1x128xf32>
    %30 = arith.mulf %28, %29 : vector<1x128xf32>
    %cst_10 = arith.constant 0.000000e+00 : f32
    %31 = vector.broadcast %cst_10 : f32 to vector<1x128xf32>
    %32 = arith.select %7, %30, %31 : vector<1x128xi1>, vector<1x128xf32>
    %cst_11 = arith.constant 0.000000e+00 : f32
    %33 = vector.broadcast %cst_11 : f32 to vector<1x128xf32>
    %34 = arith.select %7, %28, %33 : vector<1x128xi1>, vector<1x128xf32>
    %c0_12 = arith.constant 0 : index
    %c0_13 = arith.constant 0 : index
    %c0_14 = arith.constant 0 : index
    %35 = vector.load %arg5[%c0_12, %c0_13, %c0_14] : memref<1x2x128xf32, #tpu.memory_space<vmem>>, vector<1x2x128xf32>
    %36 = vector.shape_cast %35 : vector<1x2x128xf32> to vector<2x128xf32>
    %37 = tpu.concatenate %32, %34 in 0 : vector<1x128xf32>, vector<1x128xf32> -> vector<2x128xf32>
    %38 = arith.addf %36, %37 : vector<2x128xf32>
    %c0_15 = arith.constant 0 : index
    %c0_16 = arith.constant 0 : index
    %c0_17 = arith.constant 0 : index
    %39 = vector.load %arg5[%c0_15, %c0_16, %c0_17] : memref<1x2x128xf32, #tpu.memory_space<vmem>>, vector<1x2x128xf32>
    %40 = vector.shape_cast %39 : vector<1x2x128xf32> to vector<2x128xf32>
    %41 = vector.shape_cast %38 : vector<2x128xf32> to vector<1x2x128xf32>
    tpu.vector_store %arg5[%c0_15, %c0_16, %c0_17], %41 {strides = array<i32>} : memref<1x2x128xf32, #tpu.memory_space<vmem>>, vector<1x2x128xf32>,
    return
  }
  func.func @transform_0(%arg0: i32, %arg1: i32) -> (i32, i32) {
    %c1_i32 = arith.constant 1 : i32
    %0 = arith.muli %arg0, %c1_i32 : i32
    %1 = arith.addi %0, %arg1 : i32
    %c0_i32 = arith.constant 0 : i32
    %c0_i32_0 = arith.constant 0 : i32
    return %c0_i32, %1 : i32, i32
  }
  func.func @transform_1(%arg0: i32, %arg1: i32) -> (i32, i32) {
    %c1_i32 = arith.constant 1 : i32
    %0 = arith.muli %arg0, %c1_i32 : i32
    %1 = arith.addi %0, %arg1 : i32
    %c0_i32 = arith.constant 0 : i32
    %c0_i32_0 = arith.constant 0 : i32
    return %c0_i32, %1 : i32, i32
  }
  func.func @transform_2(%arg0: i32, %arg1: i32) -> (i32, i32) {
    %c0_i32 = arith.constant 0 : i32
    %c0_i32_0 = arith.constant 0 : i32
    %c0_i32_1 = arith.constant 0 : i32
    return %c0_i32, %c0_i32_0 : i32, i32
  }
  func.func @transform_3(%arg0: i32, %arg1: i32) -> (i32, i32, i32) {
    %c0_i32 = arith.constant 0 : i32
    %c0_i32_0 = arith.constant 0 : i32
    %c0_i32_1 = arith.constant 0 : i32
    return %arg0, %c0_i32, %c0_i32_0 : i32, i32, i32
  }
}

</mosaic_0001>

<llo_original>
// kernel: weighted_cross_entropy.1
$region0: #{weighted_cross_entropy.1}
  #allocation0 [shape = 'u32[]', space=smem, size = 0x4, offset = 0x4, fixed_abs, tag = 'smem constant byte address 0x4 - core index']
  #allocation1 [shape = 'u32[144,128]{1,0:T(1,128)}', space=vmem, size = 0x12000, scoped, tag = 'internal scratch']
  %s0 = inlined_call_operand.vmem [shape: f32[8,16], index: 0, kind: input, shape index: {}]
  %s1 = inlined_call_operand.vmem [shape: s32[1,128], index: 1, kind: input, shape index: {}]
  %s2 = inlined_call_operand.vmem [shape: f32[8,1], index: 2, kind: input, shape index: {}]
  %s3 = inlined_call_operand.vmem [shape: f32[1,2,128], index: 3, kind: output, shape index: {}]
  %s4 = sld [smem:[#allocation0]]
  $region26: #{weighted_cross_entropy.1} parent=0
    _
  %s6 = ssub.s32 1, %s4
  %s7 = scalar_select 0, %s6, %s4
  // Predicated region
  $region2: #{weighted_cross_entropy.1} parent=0 // pred_check
    _
  $region3: #{weighted_cross_entropy.1} parent=0 // pred_check_branch
    %9 = sbr.rel (0) target = $region5
  $region4: #{weighted_cross_entropy.1} parent=0 // pred_region
    %s10 = sadd.s32 0, 0
    %p11 = scmp.lt.s32.totalorder %s10, 0
    %s12 = scalar_select %p11, %s10, 0
    %s13 = smul.addr %s12, 8
    %s14 = scalar_lea.vmem %s0, %s13
    %s15 = sadd.s32 0, 0
  $region5: #{weighted_cross_entropy.1} parent=0 // pred_fallthru
    _
  // Predicated region
  $region6: #{weighted_cross_entropy.1} parent=0 // pred_check
    _
  $region7: #{weighted_cross_entropy.1} parent=0 // pred_check_branch
    %17 = sbr.rel (0) target = $region9
  $region8: #{weighted_cross_entropy.1} parent=0 // pred_region
    %s18 = sadd.s32 0, 0
    %p19 = scmp.lt.s32.totalorder %s18, 0
    %s20 = scalar_select %p19, %s18, 0
    %s21 = scalar_lea.vmem %s1, %s20
    %s22 = sadd.s32 0, 0
  $region9: #{weighted_cross_entropy.1} parent=0 // pred_fallthru
    _
  // Predicated region
  $region10: #{weighted_cross_entropy.1} parent=0 // pred_check
    _
  $region11: #{weighted_cross_entropy.1} parent=0 // pred_check_branch
    %24 = sbr.rel (0) target = $region13
  $region12: #{weighted_cross_entropy.1} parent=0 // pred_region
    _
  $region13: #{weighted_cross_entropy.1} parent=0 // pred_fallthru
    _
  %s25 = sadd.s32 0, 0
  %p26 = scmp.lt.s32.totalorder %s25, 0
  %s27 = scalar_select %p26, %s25, 0
  %s28 = smul.addr %s27, 8
  %s29 = scalar_lea.vmem %s0, %s28
  %s30 = sadd.s32 0, 0
  %p31 = scmp.lt.s32.totalorder %s30, 0
  %s32 = scalar_select %p31, %s30, 0
  %s33 = scalar_lea.vmem %s1, %s32
  %s34 = sadd.s32 0, 0
  %p35 = scmp.lt.s32.totalorder %s34, 0
  %s36 = scalar_select %p35, %s34, 0
  %s37 = smul.addr %s36, 8
  %s38 = scalar_lea.vmem %s0, %s37
  %s39 = sadd.s32 0, 0
  %s40 = sadd.s32 0, 0
  %p41 = scmp.lt.s32.totalorder %s40, 0
  %s42 = scalar_select %p41, %s40, 0
  %s43 = scalar_lea.vmem %s1, %s42
  %s44 = sadd.s32 0, 0
  %p45 = scmp.eq.s32.totalorder 0, 0
  // Predicated region
  $region14: #{weighted_cross_entropy.1} parent=0 // pred_check
    %p46 = pneg %p45
  $region15: #{weighted_cross_entropy.1} parent=0 // pred_check_branch
    %48 = sbr.rel (%p46) target = $region17
  $region16: #{weighted_cross_entropy.1} parent=0 // pred_region
    %49 = vst [vmem:[%s3] sm:$0x3] 0.0
  $region17: #{weighted_cross_entropy.1} parent=0 // pred_fallthru
    _
  %v50 = vld [vmem:[%s38] sm:$0xff]
  %v51 = vld [vmem:[%s43] sm:$0x1]
  %v52 = vld [vmem:[%s2] sm:$0xff]
  %vm53 = vcmp.ge.s32.totalorder %v51, 0
  %v54 = vlaneseq
  %v55 = vshrl.u32 %v54, 7
  %v56 = vlaneseq
  %v57 = vshrl.u32 %v56, 7
  %v58 = vsub.s32 0, %v57
  %v59 = vrot.slane %v51, %v58
  %vm60 = vcmp.eq.s32.totalorder %v55, %v59
  %v61 = vsel %vm60, 1, 0
  %v62 = vcvt.s32.f32 %v61
  %v63 = vrot.slane %v50, 4
  %v64 = vmax.f32 %v50, %v63
  %v65 = vrot.slane %v64, 2
  %v66 = vmax.f32 %v64, %v65
  %v67 = vrot.slane %v66, 1
  %v68 = vmax.f32 %v66, %v67
  %v69 = vsub.f32 %v50, %v68
  %v70 = vmul.f32 %v69, 1.442695
  %v71 = vpow.pop %v70
  %v72 = vrot.slane %v71, 4
  %v73 = vadd.f32 %v71, %v72
  %v74 = vrot.slane %v73, 2
  %v75 = vadd.f32 %v73, %v74
  %v76 = vrot.slane %v75, 1
  %v77 = vadd.f32 %v75, %v76
  %v78 = vlog2.pop %v77
  %v79 = vmul.f32 %v78, 0.6931472
  %v80 = vadd.f32 %v68, %v79
  %v81 = vmul.f32 %v62, %v50
  %v82 = vrot.slane %v81, 4
  %v83 = vadd.f32 %v81, %v82
  %v84 = vrot.slane %v83, 2
  %v85 = vadd.f32 %v83, %v84
  %v86 = vrot.slane %v85, 1
  %v87 = vadd.f32 %v85, %v86
  %89 = vset.pattern.permute.xlu0 0
  %90 = vperm.xlu0 %89, %v52
  %v91 = vpop.permute.xlu0 %90
  %v93 = vmul.f32 %v62, %v91
  %v94 = vrot.slane %v93, 4
  %v95 = vadd.f32 %v93, %v94
  %v96 = vrot.slane %v95, 2
  %v97 = vadd.f32 %v95, %v96
  %v98 = vrot.slane %v97, 1
  %v99 = vadd.f32 %v97, %v98
  %v100 = vsub.f32 %v80, %v87
  %v101 = vmul.f32 %v99, %v100
  %v102 = vsel %vm53, %v101, 0.0
  %v103 = vsel %vm53, %v99, 0.0
  %v104 = vld [vmem:[%s3] sm:$0x3]
  %v106 = vlaneseq
  %v107 = vshrl.u32 %v106, 7
  %v108 = vsub.s32 0, %v107
  %v109 = vrot.slane %v103, %v108
  %vm111 = vcmask 1040384
  %v112 = vsel %vm111, %v102, %v109
  %v113 = vadd.f32 %v104, %v112
  %114 = vst [vmem:[%s3] sm:$0x3] %v113
  // Predicated region
  $region18: #{weighted_cross_entropy.1} parent=0 // pred_check
    _
  $region19: #{weighted_cross_entropy.1} parent=0 // pred_check_branch
    %116 = sbr.rel (0) target = $region21
  $region20: #{weighted_cross_entropy.1} parent=0 // pred_region
    _
  $region21: #{weighted_cross_entropy.1} parent=0 // pred_fallthru
    _
  // Predicated region
  $region22: #{weighted_cross_entropy.1} parent=0 // pred_check
    _
  $region23: #{weighted_cross_entropy.1} parent=0 // pred_check_branch
    %118 = sbr.rel (0) target = $region25
  $region24: #{weighted_cross_entropy.1} parent=0 // pred_region
    _
  $region25: #{weighted_cross_entropy.1} parent=0 // pred_fallthru
    _

</llo_original>
